<compile_context>
chip_gen: v5e
topology: v5e:2x2
jax: 0.10.0
libtpu: 0.0.40
codegen_flags: <defaults>
</compile_context>

<pallas_src>
import jax
import jax.numpy as jnp
from jax.experimental import pallas as pl
from jax.experimental.pallas import tpu as pltpu


IN_DIM = 256
WIDTH = 512
BOTTLENECK = 128
NUM_CLASS = 2
N_PAD = 128                 # lane-dense padded output width (>= NUM_CLASS)
BLOCK_B_MAX = 4096          # batch tile (reviewer range 2048-8192); ~19 MiB VMEM dbl-buffered
SMALL_BATCH_XLA_CUTOFF = 1024  # below this, plain XLA dot beats pallas_call launch overhead


def _round_up(x, m):
    return (x + m - 1) // m * m


def _pick_block_b(batch):
    # Keep >=2 grid steps for large batches so dimension_semantics=("parallel",)
    # actually shards across v7x's two TensorCores; round to 8 sublanes.
    half = _round_up(max(pl.cdiv(batch, 2), 1), 8)
    return max(8, min(BLOCK_B_MAX, half))


def net_head_kernel(x_ref, w_ref, b_ref, out_ref):
    # Fused folded Linear: y = x @ W + b.
    # x arrives in its producer dtype (f32 here); cast to bf16 IN-KERNEL so the
    # wrapper never makes a separate HBM pass over x.  bf16 MXU path, f32 accum,
    # f32 bias add, bf16 lane-dense (128-wide) store.
    xb = x_ref[...].astype(jnp.bfloat16)
    acc = jnp.dot(xb, w_ref[...], preferred_element_type=jnp.float32)
    out_ref[...] = (acc + b_ref[...]).astype(out_ref.dtype)


def make_params(key, in_dim=IN_DIM, width=WIDTH, bottleneck_width=BOTTLENECK,
                num_class=NUM_CLASS):
    """Deterministic synthetic torch-Linear-equivalent params; weights stored (in, out)."""
    k1, k2, k3, k4, k5, k6 = jax.random.split(key, 6)
    scale = 0.02
    w1 = scale * jax.random.normal(k1, (in_dim, width), jnp.float32)
    b1 = 0.01 * jax.random.normal(k4, (1, width), jnp.float32)
    w2 = scale * jax.random.normal(k2, (width, bottleneck_width), jnp.float32)
    b2 = 0.01 * jax.random.normal(k5, (1, bottleneck_width), jnp.float32)
    w3 = scale * jax.random.normal(k3, (bottleneck_width, num_class), jnp.float32)
    b3 = 0.01 * jax.random.normal(k6, (1, num_class), jnp.float32)
    return (w1, b1, w2, b2, w3, b3)


def fold_params(params, num_class=NUM_CLASS, n_pad=N_PAD):
    """Collapse the activation-free 3-Linear head into one Linear (once, offline).

    Valid because there is no nonlinearity between the Linears and Dropout is
    identity at inference.  Output dim is zero-padded to 128 lanes so the
    kernel's store is an unmasked, lane-dense vst.
    """
    w1, b1, w2, b2, w3, b3 = params
    w = w1 @ w2 @ w3                      # (256, num_class)
    b = (b1 @ w2 + b2) @ w3 + b3          # (1, num_class)
    w_pad = jnp.zeros((w.shape[0], n_pad), jnp.float32).at[:, :num_class].set(w)
    b_pad = jnp.zeros((1, n_pad), jnp.float32).at[:, :num_class].set(b)
    # bf16 weights halve weight DMA; bias stays f32 (added post-accumulation).
    return w_pad.astype(jnp.bfloat16), b_pad


def net_forward(features, folded_params, *, force_pallas=False):
    """features: (B, 256) f32 (or bf16) -> padded logit slab (B, N_PAD) bf16.

    Returns the padded slab; the consumer slices [:, :num_class] (or fuses that
    slice into the following softmax/argmax) so no extra XLA pass re-touches it.
    """
    w, b = folded_params
    B, C = features.shape
    n_pad = w.shape[1]

    if B < SMALL_BATCH_XLA_CUTOFF and not force_pallas:
        # Launch-overhead-dominated regime: a plain fused XLA dot is as fast or
        # faster and avoids all per-call fixed costs.
        acc = jnp.dot(features.astype(jnp.bfloat16), w,
                      preferred_element_type=jnp.float32)
        return (acc + b).astype(jnp.bfloat16)

    block_b = _pick_block_b(B)
    grid = (pl.cdiv(B, block_b),)   # ragged trailing block: Pallas masks OOB rows

    return pl.pallas_call(
        net_head_kernel,
        out_shape=jax.ShapeDtypeStruct((B, n_pad), jnp.bfloat16),
        grid=grid,
        in_specs=[
            pl.BlockSpec((block_b, C), lambda i: (i, 0)),   # activations: streamed over batch
            pl.BlockSpec((C, n_pad), lambda i: (0, 0)),     # folded weight: VMEM-resident
            pl.BlockSpec((1, n_pad), lambda i: (0, 0)),     # bias: VMEM-resident
        ],
        out_specs=pl.BlockSpec((block_b, n_pad), lambda i: (i, 0)),
        compiler_params=pltpu.CompilerParams(
            # Batch axis is independent -> parallel (shards over v7x's 2 TCs;
            # harmless on single-TC v5e/v6e).
            dimension_semantics=("parallel",),
            # Headroom for the 4096-row double-buffered tile; needed on v5e
            # (16 MiB default scoped VMEM), safe on v6e/v7x.
            vmem_limit_bytes=48 << 20,
        ),
    )(features, w, b)


if __name__ == "__main__":
    key = jax.random.PRNGKey(0)
    k_feat, k_params = jax.random.split(key)

    B = 8  # small demo batch; multiple of 8 for clean sublane tiling
    # Synthetic stand-in for base_network(x) output: (B, 256) f32 features.
    features = jax.random.normal(k_feat, (B, IN_DIM), jnp.float32)

    params = make_params(k_params)
    folded = fold_params(params)

    # force_pallas=True so the tiny demo exercises the kernel path
    # (production small batches would take the XLA fallback).
    slab = net_forward(features, folded, force_pallas=True)
    slab = jax.block_until_ready(slab)

    assert slab.shape == (B, N_PAD), slab.shape
    assert slab.dtype == jnp.bfloat16

    # Consumer-side slice of the padded slab (deliberately not done in net_forward).
    logits = slab[:, :NUM_CLASS].astype(jnp.float32)
    assert logits.shape == (B, NUM_CLASS), logits.shape

    # Un-fused f32 reference, faithful to the original torch Sequential.
    w1, b1, w2, b2, w3, b3 = params
    ref = ((features @ w1 + b1) @ w2 + b2) @ w3 + b3
    # bf16 inputs/weights/output -> looser tolerance than pure-f32 (expected, not a bug).
    assert jnp.allclose(logits, ref, atol=5e-3, rtol=5e-3), (
        float(jnp.max(jnp.abs(logits - ref))))

    print("KERNEL_OK")
</pallas_src>

<mosaic_0001>
module attributes {stable_mosaic.version = 11 : i64} {
  func.func @net_head_kernel(%arg0: i32, %arg1: memref<8x256xf32, #tpu.memory_space<vmem>>, %arg2: memref<256x128xbf16, #tpu.memory_space<vmem>>, %arg3: memref<1x128xf32, #tpu.memory_space<vmem>>, %arg4: memref<8x128xbf16, #tpu.memory_space<vmem>>) attributes {dimension_semantics = [#tpu.dimension_semantics<parallel>], iteration_bounds = array<i64: 1>, scalar_prefetch = 0 : i64, scratch_operands = 0 : i64, tpu.core_type = #tpu.core_type<tc>, window_params = [{transform_indices = @transform_0, window_bounds = array<i64: 8, 256>}, {pipeline_mode = #tpu.pipeline_mode<synchronous>, transform_indices = @transform_1, window_bounds = array<i64: 256, 128>}, {pipeline_mode = #tpu.pipeline_mode<synchronous>, transform_indices = @transform_2, window_bounds = array<i64: 1, 128>}, {transform_indices = @transform_3, window_bounds = array<i64: 8, 128>}]} {
    %c0 = arith.constant 0 : index
    %c0_0 = arith.constant 0 : index
    %0 = vector.load %arg1[%c0, %c0_0] : memref<8x256xf32, #tpu.memory_space<vmem>>, vector<8x256xf32>
    %1 = arith.truncf %0 : vector<8x256xf32> to vector<8x256xbf16>
    %c0_1 = arith.constant 0 : index
    %c0_2 = arith.constant 0 : index
    %2 = vector.load %arg2[%c0_1, %c0_2] : memref<256x128xbf16, #tpu.memory_space<vmem>>, vector<256x128xbf16>
    %cst = arith.constant dense<0.000000e+00> : vector<8x128xf32>
    %3 = tpu.matmul %1, %2, %cst {dimension_numbers = #tpu.dot_dimension_numbers<[1], [0], [0], [1], [0, 0, 1, 1], [], []>} : vector<8x256xbf16>, vector<256x128xbf16>, vector<8x128xf32> -> vector<8x128xf32>
    %c0_3 = arith.constant 0 : index
    %c0_4 = arith.constant 0 : index
    %4 = vector.load %arg3[%c0_3, %c0_4] : memref<1x128xf32, #tpu.memory_space<vmem>>, vector<1x128xf32>
    %5 = vector.broadcast %4 : vector<1x128xf32> to vector<8x128xf32>
    %6 = arith.addf %3, %5 : vector<8x128xf32>
    %7 = arith.truncf %6 : vector<8x128xf32> to vector<8x128xbf16>
    %c0_5 = arith.constant 0 : index
    %c0_6 = arith.constant 0 : index
    %8 = vector.load %arg4[%c0_5, %c0_6] : memref<8x128xbf16, #tpu.memory_space<vmem>>, vector<8x128xbf16>
    tpu.vector_store %arg4[%c0_5, %c0_6], %7 {strides = array<i32>} : memref<8x128xbf16, #tpu.memory_space<vmem>>, vector<8x128xbf16>,
    return
  }
  func.func @transform_0(%arg0: i32) -> (i32, i32) {
    %c0_i32 = arith.constant 0 : i32
    %c0_i32_0 = arith.constant 0 : i32
    return %arg0, %c0_i32 : i32, i32
  }
  func.func @transform_1(%arg0: i32) -> (i32, i32) {
    %c0_i32 = arith.constant 0 : i32
    %c0_i32_0 = arith.constant 0 : i32
    %c0_i32_1 = arith.constant 0 : i32
    return %c0_i32, %c0_i32_0 : i32, i32
  }
  func.func @transform_2(%arg0: i32) -> (i32, i32) {
    %c0_i32 = arith.constant 0 : i32
    %c0_i32_0 = arith.constant 0 : i32
    %c0_i32_1 = arith.constant 0 : i32
    return %c0_i32, %c0_i32_0 : i32, i32
  }
  func.func @transform_3(%arg0: i32) -> (i32, i32) {
    %c0_i32 = arith.constant 0 : i32
    %c0_i32_0 = arith.constant 0 : i32
    return %arg0, %c0_i32 : i32, i32
  }
}

</mosaic_0001>

<llo_original>
// kernel: tpu_custom_call.1
$region0: #{tpu_custom_call.1}
  #allocation0 [shape = 'u32[]', space=smem, size = 0x4, offset = 0x4, fixed_abs, tag = 'smem constant byte address 0x4 - core index']
  #allocation1 [shape = 'u32[72,128]{1,0:T(1,128)}', space=vmem, size = 0x9000, scoped, tag = 'internal scratch']
  %s0 = inlined_call_operand.hbm [shape: f32[8,256], index: 0, kind: input, shape index: {}]
  %s1 = inlined_call_operand.hbm [shape: bf16[256,128], index: 1, kind: input, shape index: {}]
  %s2 = inlined_call_operand.vmem [shape: f32[1,128], index: 2, kind: input, shape index: {}]
  %s3 = inlined_call_operand.hbm [shape: bf16[8,128], index: 3, kind: output, shape index: {}]
  %s4 = sld [smem:[#allocation0]]
  $region30: #{tpu_custom_call.1} parent=0
    _
  %s6 = ssub.s32 1, %s4
  %s7 = scalar_select 0, %s6, %s4
  $region1: #{tpu_custom_call.1} parent=0
    #allocation2 [shape = 'u8[8192]{0}', space=vmem, size = 0x2000, scoped, tag = 'input window, operand 0, single buffered']
    #allocation3 [shape = 's32[1]{0}', space=sflag, size = 0x4, scoped, tag = 'scoped memory for tpu_custom_call.1']
    #allocation4 [shape = 's32[1]{0}', space=sflag, size = 0x4, scoped, tag = 'scoped memory for tpu_custom_call.1']
    #allocation5 [shape = 'u8[65536]{0}', space=vmem, size = 0x10000, scoped, tag = 'input window, operand 1, single buffered']
    #allocation6 [shape = 's32[1]{0}', space=sflag, size = 0x4, scoped, tag = 'scoped memory for tpu_custom_call.1']
    #allocation7 [shape = 'u8[2048]{0}', space=vmem, size = 0x800, scoped, tag = 'output window, operand 0, single buffered']
    %8 = vsyncpa [#allocation3], 0
    %9 = vsyncpa [#allocation6], 0
    %10 = vsyncpa [#allocation4], 0
    // Predicated region
    $region2: #{tpu_custom_call.1} parent=1 // pred_check
      _
    $region3: #{tpu_custom_call.1} parent=1 // pred_check_branch
      %12 = sbr.rel (0) target = $region5
    $region4: #{tpu_custom_call.1} parent=1 // pred_region
      %14 = vsyncadd [#allocation3], 0
      %s16 = sshll.u32 %s0, 4
      %s17 = int_to_ptr.hbm [resolvable:$true] %s16
      %s18 = sshll.u32 [#allocation2], 4
      %s19 = int_to_ptr.vmem [resolvable:$true] %s18
      %21 = dma.hbm_to_vmem [thread:$0]  %s17, 256, %s19, [#allocation3]
    $region5: #{tpu_custom_call.1} parent=1 // pred_fallthru
      _
    // Predicated region
    $region6: #{tpu_custom_call.1} parent=1 // pred_check
      _
    $region7: #{tpu_custom_call.1} parent=1 // pred_check_branch
      %23 = sbr.rel (0) target = $region9
    $region8: #{tpu_custom_call.1} parent=1 // pred_region
      %25 = vsyncadd [#allocation6], 0
      %s26 = sshll.u32 %s1, 4
      %s27 = int_to_ptr.hbm [resolvable:$true] %s26
      %s28 = sshll.u32 [#allocation5], 4
      %s29 = int_to_ptr.vmem [resolvable:$true] %s28
      %34 = dma.hbm_to_vmem [thread:$0]  %s27, 2048, %s29, [#allocation6], 64, 64, 4
    $region9: #{tpu_custom_call.1} parent=1 // pred_fallthru
      _
    // Predicated region
    $region10: #{tpu_custom_call.1} parent=1 // pred_check
      _
    $region11: #{tpu_custom_call.1} parent=1 // pred_check_branch
      %36 = sbr.rel (0) target = $region13
    $region12: #{tpu_custom_call.1} parent=1 // pred_region
      _
    $region13: #{tpu_custom_call.1} parent=1 // pred_fallthru
      _
    // Predicated region
    $region14: #{tpu_custom_call.1} parent=1 // pred_check
      _
    $region15: #{tpu_custom_call.1} parent=1 // pred_check_branch
      %38 = sbr.rel (0) target = $region17
    $region16: #{tpu_custom_call.1} parent=1 // pred_region
      %40 = dma.done [#allocation3], 256
    $region17: #{tpu_custom_call.1} parent=1 // pred_fallthru
      _
    // Predicated region
    $region18: #{tpu_custom_call.1} parent=1 // pred_check
      _
    $region19: #{tpu_custom_call.1} parent=1 // pred_check_branch
      %42 = sbr.rel (0) target = $region21
    $region20: #{tpu_custom_call.1} parent=1 // pred_region
      %44 = dma.done [#allocation6], 2048
    $region21: #{tpu_custom_call.1} parent=1 // pred_fallthru
      _
    %v45 = vld [vmem:[#allocation2] sm:$0xff]
    %v46 = vld [vmem:[#allocation2 + $0x8] sm:$0xff]
    %v47 = vpack.c.bf16 %v45, %v45
    %v48 = vpack.c.bf16 %v46, %v46
    %v49 = vld [vmem:[#allocation5] sm:$0xf]
    %v50 = vld [vmem:[#allocation5 + $0x4] sm:$0xf]
    %v51 = vld [vmem:[#allocation5 + $0x8] sm:$0xf]
    %v52 = vld [vmem:[#allocation5 + $0xc] sm:$0xf]
    %v53 = vld [vmem:[#allocation5 + $0x10] sm:$0xf]
    %v54 = vld [vmem:[#allocation5 + $0x14] sm:$0xf]
    %v55 = vld [vmem:[#allocation5 + $0x18] sm:$0xf]
    %v56 = vld [vmem:[#allocation5 + $0x1c] sm:$0xf]
    %v57 = vld [vmem:[#allocation5 + $0x20] sm:$0xf]
    %v58 = vld [vmem:[#allocation5 + $0x24] sm:$0xf]
    %v59 = vld [vmem:[#allocation5 + $0x28] sm:$0xf]
    %v60 = vld [vmem:[#allocation5 + $0x2c] sm:$0xf]
    %v61 = vld [vmem:[#allocation5 + $0x30] sm:$0xf]
    %v62 = vld [vmem:[#allocation5 + $0x34] sm:$0xf]
    %v63 = vld [vmem:[#allocation5 + $0x38] sm:$0xf]
    %v64 = vld [vmem:[#allocation5 + $0x3c] sm:$0xf]
    %v65 = vld [vmem:[#allocation5 + $0x40] sm:$0xf]
    %v66 = vld [vmem:[#allocation5 + $0x44] sm:$0xf]
    %v67 = vld [vmem:[#allocation5 + $0x48] sm:$0xf]
    %v68 = vld [vmem:[#allocation5 + $0x4c] sm:$0xf]
    %v69 = vld [vmem:[#allocation5 + $0x50] sm:$0xf]
    %v70 = vld [vmem:[#allocation5 + $0x54] sm:$0xf]
    %v71 = vld [vmem:[#allocation5 + $0x58] sm:$0xf]
    %v72 = vld [vmem:[#allocation5 + $0x5c] sm:$0xf]
    %v73 = vld [vmem:[#allocation5 + $0x60] sm:$0xf]
    %v74 = vld [vmem:[#allocation5 + $0x64] sm:$0xf]
    %v75 = vld [vmem:[#allocation5 + $0x68] sm:$0xf]
    %v76 = vld [vmem:[#allocation5 + $0x6c] sm:$0xf]
    %v77 = vld [vmem:[#allocation5 + $0x70] sm:$0xf]
    %v78 = vld [vmem:[#allocation5 + $0x74] sm:$0xf]
    %v79 = vld [vmem:[#allocation5 + $0x78] sm:$0xf]
    %v80 = vld [vmem:[#allocation5 + $0x7c] sm:$0xf]
    %v81 = vld [vmem:[%s2] sm:$0x1]
    %v83 = vperm.slane %v81, 0
    %v117 = vunpack.c.l.b16 %v49
    %v118 = vunpack.c.l.b16 %v50
    %v119 = vunpack.c.l.b16 %v51
    %v120 = vunpack.c.l.b16 %v52
    %v121 = vunpack.c.l.b16 %v53
    %v122 = vunpack.c.l.b16 %v54
    %v123 = vunpack.c.l.b16 %v55
    %v124 = vunpack.c.l.b16 %v56
    %v125 = vunpack.c.l.b16 %v57
    %v126 = vunpack.c.l.b16 %v58
    %v127 = vunpack.c.l.b16 %v59
    %v128 = vunpack.c.l.b16 %v60
    %v129 = vunpack.c.l.b16 %v61
    %v130 = vunpack.c.l.b16 %v62
    %v131 = vunpack.c.l.b16 %v63
    %v132 = vunpack.c.l.b16 %v64
    %v133 = vunpack.c.l.b16 %v65
    %v134 = vunpack.c.l.b16 %v66
    %v135 = vunpack.c.l.b16 %v67
    %v136 = vunpack.c.l.b16 %v68
    %v137 = vunpack.c.l.b16 %v69
    %v138 = vunpack.c.l.b16 %v70
    %v139 = vunpack.c.l.b16 %v71
    %v140 = vunpack.c.l.b16 %v72
    %v141 = vunpack.c.l.b16 %v73
    %v142 = vunpack.c.l.b16 %v74
    %v143 = vunpack.c.l.b16 %v75
    %v144 = vunpack.c.l.b16 %v76
    %v145 = vunpack.c.l.b16 %v77
    %v146 = vunpack.c.l.b16 %v78
    %v147 = vunpack.c.l.b16 %v79
    %v148 = vunpack.c.l.b16 %v80
    %v149 = vpack.c.b16 %v118, %v117
    %v150 = vpack.c.b16 %v120, %v119
    %v151 = vpack.c.b16 %v122, %v121
    %v152 = vpack.c.b16 %v124, %v123
    %v153 = vpack.c.b16 %v126, %v125
    %v154 = vpack.c.b16 %v128, %v127
    %v155 = vpack.c.b16 %v130, %v129
    %v156 = vpack.c.b16 %v132, %v131
    %v157 = vpack.c.b16 %v134, %v133
    %v158 = vpack.c.b16 %v136, %v135
    %v159 = vpack.c.b16 %v138, %v137
    %v160 = vpack.c.b16 %v140, %v139
    %v161 = vpack.c.b16 %v142, %v141
    %v162 = vpack.c.b16 %v144, %v143
    %v163 = vpack.c.b16 %v146, %v145
    %v164 = vpack.c.b16 %v148, %v147
    %181 = vmatpush.bf16.msra.mxu0 %v156
    %182 = vmatpush.bf16.msra.mxu0 %v155
    %183 = vmatpush.bf16.msra.mxu0 %v154
    %184 = vmatpush.bf16.msra.mxu0 %v153
    %185 = vmatpush.bf16.msra.mxu0 %v152
    %186 = vmatpush.bf16.msra.mxu0 %v151
    %187 = vmatpush.bf16.msra.mxu0 %v150
    %188 = vmatpush.bf16.msra.mxu0 %v149
    %189 = vmatmul.bf16.gmra.mxu0 %v47
    %v190 = vpop.f32.mrf.mxu0
    %v191 = vadd.f32 %v83, %v190
    %v192 = vpop.f32.mrf.mxu0
    %193 = vdwg.mxu0
    %194 = vmatpush.bf16.msra.mxu0 %v164
    %195 = vmatpush.bf16.msra.mxu0 %v163
    %196 = vmatpush.bf16.msra.mxu0 %v162
    %197 = vmatpush.bf16.msra.mxu0 %v161
    %198 = vmatpush.bf16.msra.mxu0 %v160
    %199 = vmatpush.bf16.msra.mxu0 %v159
    %200 = vmatpush.bf16.msra.mxu0 %v158
    %201 = vmatpush.bf16.msra.mxu0 %v157
    %202 = vmatmul.bf16.gmra.mxu0 %v48
    %v203 = vpop.f32.mrf.mxu0
    %v204 = vadd.f32 %v191, %v203
    %v205 = vpop.f32.mrf.mxu0
    %206 = vdwg.mxu0
    %v207 = vpack.c.bf16 %v204, %v204
    %208 = vst [vmem:[#allocation7] sm:$0xf] %v207
    // Predicated region
    $region22: #{tpu_custom_call.1} parent=1 // pred_check
      _
    $region23: #{tpu_custom_call.1} parent=1 // pred_check_branch
      %210 = sbr.rel (0) target = $region25
    $region24: #{tpu_custom_call.1} parent=1 // pred_region
      %212 = vsyncadd [#allocation4], 0
      %s214 = sshll.u32 [#allocation7], 4
      %s215 = int_to_ptr.vmem [resolvable:$true] %s214
      %s216 = sshll.u32 %s3, 4
      %s217 = int_to_ptr.hbm [resolvable:$true] %s216
      %219 = dma.vmem_to_hbm [thread:$0]  %s215, 64, %s217, [#allocation4]
    $region25: #{tpu_custom_call.1} parent=1 // pred_fallthru
      _
    // Predicated region
    $region26: #{tpu_custom_call.1} parent=1 // pred_check
      _
    $region27: #{tpu_custom_call.1} parent=1 // pred_check_branch
      %221 = sbr.rel (0) target = $region29
    $region28: #{tpu_custom_call.1} parent=1 // pred_region
      %223 = dma.done [#allocation4], 64
    $region29: #{tpu_custom_call.1} parent=1 // pred_fallthru
      _
    %224 = vsyncpa [#allocation3], 1
    %225 = vsyncpa [#allocation6], 1
    %226 = vsyncpa [#allocation4], 1

</llo_original>
